<compile_context>
chip_gen: v5e
topology: v5e:2x2
jax: 0.10.0
libtpu: 0.0.40
codegen_flags: <defaults>
</compile_context>

<pallas_src>
import functools

import jax
import jax.numpy as jnp
from jax.experimental import pallas as pl
from jax.experimental.pallas import tpu as pltpu


def _overlap_gcn_kernel(adj_ref, emb_ref, out_ref, cur_ref, acc_ref, *, layers):
    # Step-0 term: the embedding itself.  `acc` accumulates in f32; `cur`
    # carries adj^l @ E[:, tile] in the matmul dtype (bf16 when requested).
    acc_ref[...] = emb_ref[...].astype(jnp.float32)
    cur_ref[...] = emb_ref[...].astype(cur_ref.dtype)

    def body(_, carry):
        # One propagation step on this feature tile: cur <- adj @ cur; acc += cur.
        new = jnp.dot(adj_ref[...], cur_ref[...],
                      preferred_element_type=jnp.float32)
        acc_ref[...] += new
        cur_ref[...] = new.astype(cur_ref.dtype)
        return carry

    # layers is static -> fully unrolled straight-line loop (better LLO
    # packing than a grid axis whose block indices never change).
    jax.lax.fori_loop(0, layers, body, 0, unroll=True)

    # Single epilogue store in the output dtype (no per-layer RMW of out_ref).
    out_ref[...] = acc_ref[...].astype(out_ref.dtype)


def _tpu_vmem_capacity_bytes():
    try:
        return int(pltpu.get_tpu_info().vmem_capacity_bytes)
    except Exception:
        return 64 << 20  # conservative: v7x per-TensorCore VMEM


def _tpu_num_tensorcores():
    try:
        info = pltpu.get_tpu_info()
        for attr in ("num_tensorcores", "tensorcores_per_chip",
                     "num_cores", "cores_per_chip"):
            v = getattr(info, attr, None)
            if v:
                return int(v)
    except Exception:
        pass
    return 1  # v5e / v6e: single TensorCore per chip


@functools.partial(jax.jit, static_argnames=("layers", "matmul_dtype"))
def overlap_graph_convolution(embedding, adj, *, layers, matmul_dtype=None):
    """embedding: [N, D], adj: [N, N] -> [N, D] (sum of adj^k @ embedding)."""
    N, D = embedding.shape
    assert adj.shape == (N, N)
    if layers == 0:
        return embedding

    # Pad D up to a multiple of 128 so the output spec stays lane-dense
    # (unmasked stores); padded columns are zeros and sliced off at the end.
    D_pad = ((D + 127) // 128) * 128
    emb_p = embedding if D_pad == D else jnp.pad(embedding, ((0, 0), (0, D_pad - D)))

    # Optional one-time cast of the adjacency (halves its VMEM footprint and
    # takes the fast bf16 MXU path on v6e/v7x).  Prefer casting at graph-build
    # time if the adjacency is reused across calls.
    adj_c = adj if matmul_dtype is None else adj.astype(matmul_dtype)

    adj_bytes = jnp.dtype(adj_c.dtype).itemsize
    emb_bytes = jnp.dtype(emb_p.dtype).itemsize
    out_bytes = jnp.dtype(embedding.dtype).itemsize
    cur_bytes = jnp.dtype(adj_c.dtype).itemsize  # cur lives in the matmul dtype

    def _vmem_bytes(td):
        # adj single-buffered (constant index_map, Buffered(1)) + emb/out
        # double-buffered tiles + cur + f32 acc scratch.
        return (1 * N * N * adj_bytes
                + 2 * N * td * emb_bytes
                + 2 * N * td * out_bytes
                + N * td * cur_bytes
                + N * td * 4)

    capacity = _tpu_vmem_capacity_bytes()
    budget = max(capacity - (12 << 20), 16 << 20)
    prefer_two_tiles = _tpu_num_tensorcores() >= 2  # only matters on megacore (v7x)

    def _pick_td():
        candidates = sorted(
            {c for c in (D_pad, 1024, 512, 256, 128) if D_pad % c == 0},
            reverse=True)
        passes = (True, False) if prefer_two_tiles else (False,)
        for need_two in passes:
            for td in candidates:
                if need_two and D_pad // td < 2:
                    continue
                if _vmem_bytes(td) <= budget:
                    return td
        # TODO(synk): if even td=128 blows the budget (adj no longer fits
        # VMEM), switch to the row-streaming layout described above.
        return 128

    td = _pick_td()
    grid = (D_pad // td,)

    needed = _vmem_bytes(td)
    cap_limit = max(capacity - (4 << 20), 16 << 20)
    vmem_limit = int(min(max(needed + (4 << 20), 32 << 20), cap_limit))

    out = pl.pallas_call(
        functools.partial(_overlap_gcn_kernel, layers=layers),
        out_shape=jax.ShapeDtypeStruct((N, D_pad), embedding.dtype),
        grid_spec=pltpu.PrefetchScalarGridSpec(
            num_scalar_prefetch=0,
            grid=grid,
            in_specs=[
                # Full adjacency; block index constant -> DMA'd once, reused.
                # Single buffer: double-buffering a never-changing block only
                # wastes the single largest VMEM line item.
                pl.BlockSpec((N, N), lambda j: (0, 0),
                             pipeline_mode=pl.Buffered(1)),
                # Feature tile j of the input embedding.
                pl.BlockSpec((N, td), lambda j: (0, j)),
            ],
            out_specs=pl.BlockSpec((N, td), lambda j: (0, j)),
            scratch_shapes=[
                pltpu.VMEM((N, td), adj_c.dtype),   # cur = adj^l @ E tile
                pltpu.VMEM((N, td), jnp.float32),   # acc = running layer sum
            ],
        ),
        compiler_params=pltpu.CompilerParams(
            dimension_semantics=("parallel",),
            vmem_limit_bytes=vmem_limit,
        ),
    )(adj_c, emb_p)

    if D_pad != D:
        out = out[:, :D]
    return out


def overlap_graph_convolution_ref(embedding, adj, *, layers):
    group_emb = embedding
    final = [group_emb]
    for _ in range(layers):
        group_emb = adj @ group_emb
        final.append(group_emb)
    return jnp.sum(jnp.stack(final), axis=0)


if __name__ == "__main__":
    key = jax.random.PRNGKey(0)
    k_emb, k_adj, k_emb2, k_adj2 = jax.random.split(key, 4)

    # --- Main check: f32, D multiple of 128 ---
    N, D, LAYERS = 64, 128, 3
    embedding = jax.random.normal(k_emb, (N, D), dtype=jnp.float32)
    # Row-normalized dense "adjacency" so repeated propagation stays well-scaled.
    adj_raw = jax.random.uniform(k_adj, (N, N), dtype=jnp.float32)
    adj = adj_raw / jnp.sum(adj_raw, axis=1, keepdims=True)

    out = overlap_graph_convolution(embedding, adj, layers=LAYERS)
    out = jax.block_until_ready(out)
    ref = overlap_graph_convolution_ref(embedding, adj, layers=LAYERS)
    assert out.shape == (N, D)
    assert jnp.allclose(out, ref, atol=1e-4, rtol=1e-4), float(
        jnp.max(jnp.abs(out - ref))
    )

    # --- bf16-matmul path (MXU fast path on v6e/v7x), loosened tolerance ---
    out_bf16 = overlap_graph_convolution(
        embedding, adj, layers=LAYERS, matmul_dtype=jnp.bfloat16
    )
    out_bf16 = jax.block_until_ready(out_bf16)
    assert jnp.allclose(out_bf16, ref, atol=5e-2, rtol=5e-2), float(
        jnp.max(jnp.abs(out_bf16 - ref))
    )

    # --- D not a multiple of 128: exercises the padding path ---
    N2, D2, L2 = 32, 96, 2
    emb2 = jax.random.normal(k_emb2, (N2, D2), dtype=jnp.float32)
    adj2_raw = jax.random.uniform(k_adj2, (N2, N2), dtype=jnp.float32)
    adj2 = adj2_raw / jnp.sum(adj2_raw, axis=1, keepdims=True)

    out2 = overlap_graph_convolution(emb2, adj2, layers=L2)
    out2 = jax.block_until_ready(out2)
    ref2 = overlap_graph_convolution_ref(emb2, adj2, layers=L2)
    assert out2.shape == (N2, D2)
    assert jnp.allclose(out2, ref2, atol=1e-4, rtol=1e-4), float(
        jnp.max(jnp.abs(out2 - ref2))
    )

    print("KERNEL_OK")
</pallas_src>

<mosaic_0001>
module attributes {stable_mosaic.version = 11 : i64} {
  func.func @_overlap_gcn_kernel(%arg0: i32, %arg1: memref<64x64xf32, #tpu.memory_space<vmem>>, %arg2: memref<64x128xf32, #tpu.memory_space<vmem>>, %arg3: memref<64x128xf32, #tpu.memory_space<vmem>>, %arg4: memref<64x128xf32, #tpu.memory_space<vmem>>, %arg5: memref<64x128xf32, #tpu.memory_space<vmem>>) attributes {dimension_semantics = [#tpu.dimension_semantics<parallel>], iteration_bounds = array<i64: 1>, scalar_prefetch = 0 : i64, scratch_operands = 2 : i64, tpu.core_type = #tpu.core_type<tc>, window_params = [{pipeline_mode = #tpu.pipeline_mode<synchronous>, transform_indices = @transform_0, window_bounds = array<i64: 64, 64>}, {transform_indices = @transform_1, window_bounds = array<i64: 64, 128>}, {transform_indices = @transform_2, window_bounds = array<i64: 64, 128>}]} {
    %c0 = arith.constant 0 : index
    %c0_0 = arith.constant 0 : index
    %0 = vector.load %arg2[%c0, %c0_0] : memref<64x128xf32, #tpu.memory_space<vmem>>, vector<64x128xf32>
    %c0_1 = arith.constant 0 : index
    %c0_2 = arith.constant 0 : index
    %1 = vector.load %arg5[%c0_1, %c0_2] : memref<64x128xf32, #tpu.memory_space<vmem>>, vector<64x128xf32>
    tpu.vector_store %arg5[%c0_1, %c0_2], %0 {strides = array<i32>} : memref<64x128xf32, #tpu.memory_space<vmem>>, vector<64x128xf32>,
    %c0_3 = arith.constant 0 : index
    %c0_4 = arith.constant 0 : index
    %2 = vector.load %arg2[%c0_3, %c0_4] : memref<64x128xf32, #tpu.memory_space<vmem>>, vector<64x128xf32>
    %c0_5 = arith.constant 0 : index
    %c0_6 = arith.constant 0 : index
    %3 = vector.load %arg4[%c0_5, %c0_6] : memref<64x128xf32, #tpu.memory_space<vmem>>, vector<64x128xf32>
    tpu.vector_store %arg4[%c0_5, %c0_6], %2 {strides = array<i32>} : memref<64x128xf32, #tpu.memory_space<vmem>>, vector<64x128xf32>,
    %c0_i32 = arith.constant 0 : i32
    %c0_7 = arith.constant 0 : index
    %c0_8 = arith.constant 0 : index
    %4 = vector.load %arg1[%c0_7, %c0_8] : memref<64x64xf32, #tpu.memory_space<vmem>>, vector<64x64xf32>
    %c0_9 = arith.constant 0 : index
    %c0_10 = arith.constant 0 : index
    %5 = vector.load %arg4[%c0_9, %c0_10] : memref<64x128xf32, #tpu.memory_space<vmem>>, vector<64x128xf32>
    %cst = arith.constant dense<0.000000e+00> : vector<64x128xf32>
    %6 = tpu.matmul %4, %5, %cst {dimension_numbers = #tpu.dot_dimension_numbers<[1], [0], [0], [1], [0, 0, 1, 1], [], []>} : vector<64x64xf32>, vector<64x128xf32>, vector<64x128xf32> -> vector<64x128xf32>
    %c0_11 = arith.constant 0 : index
    %c0_12 = arith.constant 0 : index
    %7 = vector.load %arg5[%c0_11, %c0_12] : memref<64x128xf32, #tpu.memory_space<vmem>>, vector<64x128xf32>
    %8 = arith.addf %7, %6 : vector<64x128xf32>
    %c0_13 = arith.constant 0 : index
    %c0_14 = arith.constant 0 : index
    %9 = vector.load %arg5[%c0_13, %c0_14] : memref<64x128xf32, #tpu.memory_space<vmem>>, vector<64x128xf32>
    tpu.vector_store %arg5[%c0_13, %c0_14], %8 {strides = array<i32>} : memref<64x128xf32, #tpu.memory_space<vmem>>, vector<64x128xf32>,
    %c0_15 = arith.constant 0 : index
    %c0_16 = arith.constant 0 : index
    %10 = vector.load %arg4[%c0_15, %c0_16] : memref<64x128xf32, #tpu.memory_space<vmem>>, vector<64x128xf32>
    tpu.vector_store %arg4[%c0_15, %c0_16], %6 {strides = array<i32>} : memref<64x128xf32, #tpu.memory_space<vmem>>, vector<64x128xf32>,
    %c1_i32 = arith.constant 1 : i32
    %c0_17 = arith.constant 0 : index
    %c0_18 = arith.constant 0 : index
    %11 = vector.load %arg1[%c0_17, %c0_18] : memref<64x64xf32, #tpu.memory_space<vmem>>, vector<64x64xf32>
    %c0_19 = arith.constant 0 : index
    %c0_20 = arith.constant 0 : index
    %12 = vector.load %arg4[%c0_19, %c0_20] : memref<64x128xf32, #tpu.memory_space<vmem>>, vector<64x128xf32>
    %cst_21 = arith.constant dense<0.000000e+00> : vector<64x128xf32>
    %13 = tpu.matmul %11, %12, %cst_21 {dimension_numbers = #tpu.dot_dimension_numbers<[1], [0], [0], [1], [0, 0, 1, 1], [], []>} : vector<64x64xf32>, vector<64x128xf32>, vector<64x128xf32> -> vector<64x128xf32>
    %c0_22 = arith.constant 0 : index
    %c0_23 = arith.constant 0 : index
    %14 = vector.load %arg5[%c0_22, %c0_23] : memref<64x128xf32, #tpu.memory_space<vmem>>, vector<64x128xf32>
    %15 = arith.addf %14, %13 : vector<64x128xf32>
    %c0_24 = arith.constant 0 : index
    %c0_25 = arith.constant 0 : index
    %16 = vector.load %arg5[%c0_24, %c0_25] : memref<64x128xf32, #tpu.memory_space<vmem>>, vector<64x128xf32>
    tpu.vector_store %arg5[%c0_24, %c0_25], %15 {strides = array<i32>} : memref<64x128xf32, #tpu.memory_space<vmem>>, vector<64x128xf32>,
    %c0_26 = arith.constant 0 : index
    %c0_27 = arith.constant 0 : index
    %17 = vector.load %arg4[%c0_26, %c0_27] : memref<64x128xf32, #tpu.memory_space<vmem>>, vector<64x128xf32>
    tpu.vector_store %arg4[%c0_26, %c0_27], %13 {strides = array<i32>} : memref<64x128xf32, #tpu.memory_space<vmem>>, vector<64x128xf32>,
    %c2_i32 = arith.constant 2 : i32
    %c0_28 = arith.constant 0 : index
    %c0_29 = arith.constant 0 : index
    %18 = vector.load %arg1[%c0_28, %c0_29] : memref<64x64xf32, #tpu.memory_space<vmem>>, vector<64x64xf32>
    %c0_30 = arith.constant 0 : index
    %c0_31 = arith.constant 0 : index
    %19 = vector.load %arg4[%c0_30, %c0_31] : memref<64x128xf32, #tpu.memory_space<vmem>>, vector<64x128xf32>
    %cst_32 = arith.constant dense<0.000000e+00> : vector<64x128xf32>
    %20 = tpu.matmul %18, %19, %cst_32 {dimension_numbers = #tpu.dot_dimension_numbers<[1], [0], [0], [1], [0, 0, 1, 1], [], []>} : vector<64x64xf32>, vector<64x128xf32>, vector<64x128xf32> -> vector<64x128xf32>
    %c0_33 = arith.constant 0 : index
    %c0_34 = arith.constant 0 : index
    %21 = vector.load %arg5[%c0_33, %c0_34] : memref<64x128xf32, #tpu.memory_space<vmem>>, vector<64x128xf32>
    %22 = arith.addf %21, %20 : vector<64x128xf32>
    %c0_35 = arith.constant 0 : index
    %c0_36 = arith.constant 0 : index
    %23 = vector.load %arg5[%c0_35, %c0_36] : memref<64x128xf32, #tpu.memory_space<vmem>>, vector<64x128xf32>
    tpu.vector_store %arg5[%c0_35, %c0_36], %22 {strides = array<i32>} : memref<64x128xf32, #tpu.memory_space<vmem>>, vector<64x128xf32>,
    %c0_37 = arith.constant 0 : index
    %c0_38 = arith.constant 0 : index
    %24 = vector.load %arg4[%c0_37, %c0_38] : memref<64x128xf32, #tpu.memory_space<vmem>>, vector<64x128xf32>
    tpu.vector_store %arg4[%c0_37, %c0_38], %20 {strides = array<i32>} : memref<64x128xf32, #tpu.memory_space<vmem>>, vector<64x128xf32>,
    %c0_39 = arith.constant 0 : index
    %c0_40 = arith.constant 0 : index
    %25 = vector.load %arg5[%c0_39, %c0_40] : memref<64x128xf32, #tpu.memory_space<vmem>>, vector<64x128xf32>
    %c0_41 = arith.constant 0 : index
    %c0_42 = arith.constant 0 : index
    %26 = vector.load %arg3[%c0_41, %c0_42] : memref<64x128xf32, #tpu.memory_space<vmem>>, vector<64x128xf32>
    tpu.vector_store %arg3[%c0_41, %c0_42], %25 {strides = array<i32>} : memref<64x128xf32, #tpu.memory_space<vmem>>, vector<64x128xf32>,
    return
  }
  func.func @transform_0(%arg0: i32) -> (i32, i32) {
    %c0_i32 = arith.constant 0 : i32
    %c0_i32_0 = arith.constant 0 : i32
    %c0_i32_1 = arith.constant 0 : i32
    return %c0_i32, %c0_i32_0 : i32, i32
  }
  func.func @transform_1(%arg0: i32) -> (i32, i32) {
    %c0_i32 = arith.constant 0 : i32
    %c0_i32_0 = arith.constant 0 : i32
    return %c0_i32, %arg0 : i32, i32
  }
  func.func @transform_2(%arg0: i32) -> (i32, i32) {
    %c0_i32 = arith.constant 0 : i32
    %c0_i32_0 = arith.constant 0 : i32
    return %c0_i32, %arg0 : i32, i32
  }
}

</mosaic_0001>

<llo_original>
// kernel: overlap_graph_convolution.1
$region0: #{overlap_graph_convolution.1}
  #allocation0 [shape = 'u32[]', space=smem, size = 0x4, offset = 0x4, fixed_abs, tag = 'smem constant byte address 0x4 - core index']
  #allocation1 [shape = 'u32[72,128]{1,0:T(1,128)}', space=vmem, size = 0x9000, scoped, tag = 'internal scratch']
  #allocation2 [shape = 'f32[64,128]{1,0:T(8,128)}', space=vmem, size = 0x8000, scoped, tag = 'scratch operand']
  #allocation3 [shape = 'f32[64,128]{1,0:T(8,128)}', space=vmem, size = 0x8000, scoped, tag = 'scratch operand']
  %s0 = inlined_call_operand.hbm [shape: f32[64,64], index: 0, kind: input, shape index: {}]
  %s1 = inlined_call_operand.hbm [shape: f32[64,128], index: 1, kind: input, shape index: {}]
  %s2 = inlined_call_operand.hbm [shape: f32[64,128], index: 2, kind: output, shape index: {}]
  %s3 = sld [smem:[#allocation0]]
  $region26: #{overlap_graph_convolution.1} parent=0
    _
  %s5 = ssub.s32 1, %s3
  %s6 = scalar_select 0, %s5, %s3
  $region1: #{overlap_graph_convolution.1} parent=0
    #allocation4 [shape = 'u8[32768]{0}', space=vmem, size = 0x8000, scoped, tag = 'input window, operand 0, single buffered']
    #allocation5 [shape = 's32[1]{0}', space=sflag, size = 0x4, scoped, tag = 'scoped memory for overlap_graph_convolution.1']
    #allocation6 [shape = 's32[1]{0}', space=sflag, size = 0x4, scoped, tag = 'scoped memory for overlap_graph_convolution.1']
    #allocation7 [shape = 'u8[32768]{0}', space=vmem, size = 0x8000, scoped, tag = 'input window, operand 1, single buffered']
    #allocation8 [shape = 's32[1]{0}', space=sflag, size = 0x4, scoped, tag = 'scoped memory for overlap_graph_convolution.1']
    #allocation9 [shape = 'u8[32768]{0}', space=vmem, size = 0x8000, scoped, tag = 'output window, operand 0, single buffered']
    %7 = vsyncpa [#allocation5], 0
    %8 = vsyncpa [#allocation8], 0
    %9 = vsyncpa [#allocation6], 0
    // Predicated region
    $region2: #{overlap_graph_convolution.1} parent=1 // pred_check
      _
    $region3: #{overlap_graph_convolution.1} parent=1 // pred_check_branch
      %11 = sbr.rel (0) target = $region5
    $region4: #{overlap_graph_convolution.1} parent=1 // pred_region
      %13 = vsyncadd [#allocation5], 0
      %s14 = sshll.u32 %s0, 4
      %s15 = int_to_ptr.hbm [resolvable:$true] %s14
      %s16 = sshll.u32 [#allocation4], 4
      %s17 = int_to_ptr.vmem [resolvable:$true] %s16
      %22 = dma.hbm_to_vmem [thread:$0]  %s15, 1024, %s17, [#allocation5], 128, 128, 8
    $region5: #{overlap_graph_convolution.1} parent=1 // pred_fallthru
      _
    // Predicated region
    $region6: #{overlap_graph_convolution.1} parent=1 // pred_check
      _
    $region7: #{overlap_graph_convolution.1} parent=1 // pred_check_branch
      %24 = sbr.rel (0) target = $region9
    $region8: #{overlap_graph_convolution.1} parent=1 // pred_region
      %26 = vsyncadd [#allocation8], 0
      %s27 = sshll.u32 %s1, 4
      %s28 = int_to_ptr.hbm [resolvable:$true] %s27
      %s29 = sshll.u32 [#allocation7], 4
      %s30 = int_to_ptr.vmem [resolvable:$true] %s29
      %35 = dma.hbm_to_vmem [thread:$0]  %s28, 1024, %s30, [#allocation8], 128, 128, 8
    $region9: #{overlap_graph_convolution.1} parent=1 // pred_fallthru
      _
    // Predicated region
    $region10: #{overlap_graph_convolution.1} parent=1 // pred_check
      _
    $region11: #{overlap_graph_convolution.1} parent=1 // pred_check_branch
      %37 = sbr.rel (0) target = $region13
    $region12: #{overlap_graph_convolution.1} parent=1 // pred_region
      %39 = dma.done [#allocation5], 1024
    $region13: #{overlap_graph_convolution.1} parent=1 // pred_fallthru
      _
    // Predicated region
    $region14: #{overlap_graph_convolution.1} parent=1 // pred_check
      _
    $region15: #{overlap_graph_convolution.1} parent=1 // pred_check_branch
      %41 = sbr.rel (0) target = $region17
    $region16: #{overlap_graph_convolution.1} parent=1 // pred_region
      %43 = dma.done [#allocation8], 1024
    $region17: #{overlap_graph_convolution.1} parent=1 // pred_fallthru
      _
    %v44 = vld [vmem:[#allocation7] sm:$0xff]
    %v45 = vld [vmem:[#allocation7 + $0x8] sm:$0xff]
    %v46 = vld [vmem:[#allocation7 + $0x10] sm:$0xff]
    %v47 = vld [vmem:[#allocation7 + $0x18] sm:$0xff]
    %v48 = vld [vmem:[#allocation7 + $0x20] sm:$0xff]
    %v49 = vld [vmem:[#allocation7 + $0x28] sm:$0xff]
    %v50 = vld [vmem:[#allocation7 + $0x30] sm:$0xff]
    %v51 = vld [vmem:[#allocation7 + $0x38] sm:$0xff]
    %52 = vst [vmem:[#allocation3] sm:$0xff] %v44
    %53 = vst [vmem:[#allocation3 + $0x8] sm:$0xff] %v45
    %54 = vst [vmem:[#allocation3 + $0x10] sm:$0xff] %v46
    %55 = vst [vmem:[#allocation3 + $0x18] sm:$0xff] %v47
    %56 = vst [vmem:[#allocation3 + $0x20] sm:$0xff] %v48
    %57 = vst [vmem:[#allocation3 + $0x28] sm:$0xff] %v49
    %58 = vst [vmem:[#allocation3 + $0x30] sm:$0xff] %v50
    %59 = vst [vmem:[#allocation3 + $0x38] sm:$0xff] %v51
    %v60 = vld [vmem:[#allocation7] sm:$0xff]
    %v61 = vld [vmem:[#allocation7 + $0x8] sm:$0xff]
    %v62 = vld [vmem:[#allocation7 + $0x10] sm:$0xff]
    %v63 = vld [vmem:[#allocation7 + $0x18] sm:$0xff]
    %v64 = vld [vmem:[#allocation7 + $0x20] sm:$0xff]
    %v65 = vld [vmem:[#allocation7 + $0x28] sm:$0xff]
    %v66 = vld [vmem:[#allocation7 + $0x30] sm:$0xff]
    %v67 = vld [vmem:[#allocation7 + $0x38] sm:$0xff]
    %68 = vst [vmem:[#allocation2] sm:$0xff] %v60
    %69 = vst [vmem:[#allocation2 + $0x8] sm:$0xff] %v61
    %70 = vst [vmem:[#allocation2 + $0x10] sm:$0xff] %v62
    %71 = vst [vmem:[#allocation2 + $0x18] sm:$0xff] %v63
    %72 = vst [vmem:[#allocation2 + $0x20] sm:$0xff] %v64
    %73 = vst [vmem:[#allocation2 + $0x28] sm:$0xff] %v65
    %74 = vst [vmem:[#allocation2 + $0x30] sm:$0xff] %v66
    %75 = vst [vmem:[#allocation2 + $0x38] sm:$0xff] %v67
    %v76 = vld [vmem:[#allocation4] sm:$0xff]
    %v77 = vld [vmem:[#allocation4 + $0x8] sm:$0xff]
    %v78 = vld [vmem:[#allocation4 + $0x10] sm:$0xff]
    %v79 = vld [vmem:[#allocation4 + $0x18] sm:$0xff]
    %v80 = vld [vmem:[#allocation4 + $0x20] sm:$0xff]
    %v81 = vld [vmem:[#allocation4 + $0x28] sm:$0xff]
    %v82 = vld [vmem:[#allocation4 + $0x30] sm:$0xff]
    %v83 = vld [vmem:[#allocation4 + $0x38] sm:$0xff]
    %v84 = vld [vmem:[#allocation2] sm:$0xff]
    %v85 = vld [vmem:[#allocation2 + $0x8] sm:$0xff]
    %v86 = vld [vmem:[#allocation2 + $0x10] sm:$0xff]
    %v87 = vld [vmem:[#allocation2 + $0x18] sm:$0xff]
    %v88 = vld [vmem:[#allocation2 + $0x20] sm:$0xff]
    %v89 = vld [vmem:[#allocation2 + $0x28] sm:$0xff]
    %v90 = vld [vmem:[#allocation2 + $0x30] sm:$0xff]
    %v91 = vld [vmem:[#allocation2 + $0x38] sm:$0xff]
    %vm92 = vcmask 523264
    %v94 = vsel %vm92, %v76, 0
    %v97 = vsel %vm92, %v77, 0
    %v100 = vsel %vm92, %v78, 0
    %v103 = vsel %vm92, %v79, 0
    %v106 = vsel %vm92, %v80, 0
    %v109 = vsel %vm92, %v81, 0
    %v112 = vsel %vm92, %v82, 0
    %v115 = vsel %vm92, %v83, 0
    %117 = vmatpush.msra.mxu0 0.0
    %118 = vmatpush.msra.mxu0 0.0
    %119 = vmatpush.msra.mxu0 0.0
    %120 = vmatpush.msra.mxu0 0.0
    %121 = vmatpush.msra.mxu0 0.0
    %122 = vmatpush.msra.mxu0 0.0
    %123 = vmatpush.msra.mxu0 0.0
    %124 = vmatpush.msra.mxu0 0.0
    %125 = vmatpush.msra.mxu0 %v91
    %126 = vmatpush.msra.mxu0 %v90
    %127 = vmatpush.msra.mxu0 %v89
    %128 = vmatpush.msra.mxu0 %v88
    %129 = vmatpush.msra.mxu0 %v87
    %130 = vmatpush.msra.mxu0 %v86
    %131 = vmatpush.msra.mxu0 %v85
    %132 = vmatpush.msra.mxu0 %v84
    %133 = vmatmul.f32.gmra.mxu0 %v94
    %v134 = vpop.f32.mrf.mxu0
    %v135 = vadd.f32 0.0, %v134
    %136 = vmatmul.f32.gmra.mxu0 %v97
    %v137 = vpop.f32.mrf.mxu0
    %v138 = vadd.f32 0.0, %v137
    %139 = vmatmul.f32.gmra.mxu0 %v100
    %v140 = vpop.f32.mrf.mxu0
    %v141 = vadd.f32 0.0, %v140
    %142 = vmatmul.f32.gmra.mxu0 %v103
    %v143 = vpop.f32.mrf.mxu0
    %v144 = vadd.f32 0.0, %v143
    %145 = vmatmul.f32.gmra.mxu0 %v106
    %v146 = vpop.f32.mrf.mxu0
    %v147 = vadd.f32 0.0, %v146
    %148 = vmatmul.f32.gmra.mxu0 %v109
    %v149 = vpop.f32.mrf.mxu0
    %v150 = vadd.f32 0.0, %v149
    %151 = vmatmul.f32.gmra.mxu0 %v112
    %v152 = vpop.f32.mrf.mxu0
    %v153 = vadd.f32 0.0, %v152
    %154 = vmatmul.f32.gmra.mxu0 %v115
    %v155 = vpop.f32.mrf.mxu0
    %v156 = vadd.f32 0.0, %v155
    %157 = vdwg.mxu0
    %v158 = vld [vmem:[#allocation3] sm:$0xff]
    %v159 = vld [vmem:[#allocation3 + $0x8] sm:$0xff]
    %v160 = vld [vmem:[#allocation3 + $0x10] sm:$0xff]
    %v161 = vld [vmem:[#allocation3 + $0x18] sm:$0xff]
    %v162 = vld [vmem:[#allocation3 + $0x20] sm:$0xff]
    %v163 = vld [vmem:[#allocation3 + $0x28] sm:$0xff]
    %v164 = vld [vmem:[#allocation3 + $0x30] sm:$0xff]
    %v165 = vld [vmem:[#allocation3 + $0x38] sm:$0xff]
    %v166 = vadd.f32 %v158, %v135
    %v167 = vadd.f32 %v159, %v138
    %v168 = vadd.f32 %v160, %v141
    %v169 = vadd.f32 %v161, %v144
    %v170 = vadd.f32 %v162, %v147
    %v171 = vadd.f32 %v163, %v150
    %v172 = vadd.f32 %v164, %v153
    %v173 = vadd.f32 %v165, %v156
    %174 = vst [vmem:[#allocation3] sm:$0xff] %v166
    %175 = vst [vmem:[#allocation3 + $0x8] sm:$0xff] %v167
    %176 = vst [vmem:[#allocation3 + $0x10] sm:$0xff] %v168
    %177 = vst [vmem:[#allocation3 + $0x18] sm:$0xff] %v169
    %178 = vst [vmem:[#allocation3 + $0x20] sm:$0xff] %v170
    %179 = vst [vmem:[#allocation3 + $0x28] sm:$0xff] %v171
    %180 = vst [vmem:[#allocation3 + $0x30] sm:$0xff] %v172
    %181 = vst [vmem:[#allocation3 + $0x38] sm:$0xff] %v173
    %182 = vst [vmem:[#allocation2] sm:$0xff] %v135
    %183 = vst [vmem:[#allocation2 + $0x8] sm:$0xff] %v138
    %184 = vst [vmem:[#allocation2 + $0x10] sm:$0xff] %v141
    %185 = vst [vmem:[#allocation2 + $0x18] sm:$0xff] %v144
    %186 = vst [vmem:[#allocation2 + $0x20] sm:$0xff] %v147
    %187 = vst [vmem:[#allocation2 + $0x28] sm:$0xff] %v150
    %188 = vst [vmem:[#allocation2 + $0x30] sm:$0xff] %v153
    %189 = vst [vmem:[#allocation2 + $0x38] sm:$0xff] %v156
    %v190 = vld [vmem:[#allocation4] sm:$0xff]
    %v191 = vld [vmem:[#allocation4 + $0x8] sm:$0xff]
    %v192 = vld [vmem:[#allocation4 + $0x10] sm:$0xff]
    %v193 = vld [vmem:[#allocation4 + $0x18] sm:$0xff]
    %v194 = vld [vmem:[#allocation4 + $0x20] sm:$0xff]
    %v195 = vld [vmem:[#allocation4 + $0x28] sm:$0xff]
    %v196 = vld [vmem:[#allocation4 + $0x30] sm:$0xff]
    %v197 = vld [vmem:[#allocation4 + $0x38] sm:$0xff]
    %v198 = vld [vmem:[#allocation2] sm:$0xff]
    %v199 = vld [vmem:[#allocation2 + $0x8] sm:$0xff]
    %v200 = vld [vmem:[#allocation2 + $0x10] sm:$0xff]
    %v201 = vld [vmem:[#allocation2 + $0x18] sm:$0xff]
    %v202 = vld [vmem:[#allocation2 + $0x20] sm:$0xff]
    %v203 = vld [vmem:[#allocation2 + $0x28] sm:$0xff]
    %v204 = vld [vmem:[#allocation2 + $0x30] sm:$0xff]
    %v205 = vld [vmem:[#allocation2 + $0x38] sm:$0xff]
    %v207 = vsel %vm92, %v190, 0
    %v210 = vsel %vm92, %v191, 0
    %v213 = vsel %vm92, %v192, 0
    %v216 = vsel %vm92, %v193, 0
    %v219 = vsel %vm92, %v194, 0
    %v222 = vsel %vm92, %v195, 0
    %v225 = vsel %vm92, %v196, 0
    %v228 = vsel %vm92, %v197, 0
    %230 = vmatpush.msra.mxu0 0.0
    %231 = vmatpush.msra.mxu0 0.0
    %232 = vmatpush.msra.mxu0 0.0
    %233 = vmatpush.msra.mxu0 0.0
    %234 = vmatpush.msra.mxu0 0.0
    %235 = vmatpush.msra.mxu0 0.0
    %236 = vmatpush.msra.mxu0 0.0
    %237 = vmatpush.msra.mxu0 0.0
    %238 = vmatpush.msra.mxu0 %v205
    %239 = vmatpush.msra.mxu0 %v204
    %240 = vmatpush.msra.mxu0 %v203
    %241 = vmatpush.msra.mxu0 %v202
    %242 = vmatpush.msra.mxu0 %v201
    %243 = vmatpush.msra.mxu0 %v200
    %244 = vmatpush.msra.mxu0 %v199
    %245 = vmatpush.msra.mxu0 %v198
    %246 = vmatmul.f32.gmra.mxu0 %v207
    %v247 = vpop.f32.mrf.mxu0
    %v248 = vadd.f32 0.0, %v247
    %249 = vmatmul.f32.gmra.mxu0 %v210
    %v250 = vpop.f32.mrf.mxu0
    %v251 = vadd.f32 0.0, %v250
    %252 = vmatmul.f32.gmra.mxu0 %v213
    %v253 = vpop.f32.mrf.mxu0
    %v254 = vadd.f32 0.0, %v253
    %255 = vmatmul.f32.gmra.mxu0 %v216
    %v256 = vpop.f32.mrf.mxu0
    %v257 = vadd.f32 0.0, %v256
    %258 = vmatmul.f32.gmra.mxu0 %v219
    %v259 = vpop.f32.mrf.mxu0
    %v260 = vadd.f32 0.0, %v259
    %261 = vmatmul.f32.gmra.mxu0 %v222
    %v262 = vpop.f32.mrf.mxu0
    %v263 = vadd.f32 0.0, %v262
    %264 = vmatmul.f32.gmra.mxu0 %v225
    %v265 = vpop.f32.mrf.mxu0
    %v266 = vadd.f32 0.0, %v265
    %267 = vmatmul.f32.gmra.mxu0 %v228
    %v268 = vpop.f32.mrf.mxu0
    %v269 = vadd.f32 0.0, %v268
    %270 = vdwg.mxu0
    %v271 = vld [vmem:[#allocation3] sm:$0xff]
    %v272 = vld [vmem:[#allocation3 + $0x8] sm:$0xff]
    %v273 = vld [vmem:[#allocation3 + $0x10] sm:$0xff]
    %v274 = vld [vmem:[#allocation3 + $0x18] sm:$0xff]
    %v275 = vld [vmem:[#allocation3 + $0x20] sm:$0xff]
    %v276 = vld [vmem:[#allocation3 + $0x28] sm:$0xff]
    %v277 = vld [vmem:[#allocation3 + $0x30] sm:$0xff]
    %v278 = vld [vmem:[#allocation3 + $0x38] sm:$0xff]
    %v279 = vadd.f32 %v271, %v248
    %v280 = vadd.f32 %v272, %v251
    %v281 = vadd.f32 %v273, %v254
    %v282 = vadd.f32 %v274, %v257
    %v283 = vadd.f32 %v275, %v260
    %v284 = vadd.f32 %v276, %v263
    %v285 = vadd.f32 %v277, %v266
    %v286 = vadd.f32 %v278, %v269
    %287 = vst [vmem:[#allocation3] sm:$0xff] %v279
    %288 = vst [vmem:[#allocation3 + $0x8] sm:$0xff] %v280
    %289 = vst [vmem:[#allocation3 + $0x10] sm:$0xff] %v281
    %290 = vst [vmem:[#allocation3 + $0x18] sm:$0xff] %v282
    %291 = vst [vmem:[#allocation3 + $0x20] sm:$0xff] %v283
    %292 = vst [vmem:[#allocation3 + $0x28] sm:$0xff] %v284
    %293 = vst [vmem:[#allocation3 + $0x30] sm:$0xff] %v285
    %294 = vst [vmem:[#allocation3 + $0x38] sm:$0xff] %v286
    %295 = vst [vmem:[#allocation2] sm:$0xff] %v248
    %296 = vst [vmem:[#allocation2 + $0x8] sm:$0xff] %v251
    %297 = vst [vmem:[#allocation2 + $0x10] sm:$0xff] %v254
    %298 = vst [vmem:[#allocation2 + $0x18] sm:$0xff] %v257
    %299 = vst [vmem:[#allocation2 + $0x20] sm:$0xff] %v260
    %300 = vst [vmem:[#allocation2 + $0x28] sm:$0xff] %v263
    %301 = vst [vmem:[#allocation2 + $0x30] sm:$0xff] %v266
    %302 = vst [vmem:[#allocation2 + $0x38] sm:$0xff] %v269
    %v303 = vld [vmem:[#allocation4] sm:$0xff]
    %v304 = vld [vmem:[#allocation4 + $0x8] sm:$0xff]
    %v305 = vld [vmem:[#allocation4 + $0x10] sm:$0xff]
    %v306 = vld [vmem:[#allocation4 + $0x18] sm:$0xff]
    %v307 = vld [vmem:[#allocation4 + $0x20] sm:$0xff]
    %v308 = vld [vmem:[#allocation4 + $0x28] sm:$0xff]
    %v309 = vld [vmem:[#allocation4 + $0x30] sm:$0xff]
    %v310 = vld [vmem:[#allocation4 + $0x38] sm:$0xff]
    %v311 = vld [vmem:[#allocation2] sm:$0xff]
    %v312 = vld [vmem:[#allocation2 + $0x8] sm:$0xff]
    %v313 = vld [vmem:[#allocation2 + $0x10] sm:$0xff]
    %v314 = vld [vmem:[#allocation2 + $0x18] sm:$0xff]
    %v315 = vld [vmem:[#allocation2 + $0x20] sm:$0xff]
    %v316 = vld [vmem:[#allocation2 + $0x28] sm:$0xff]
    %v317 = vld [vmem:[#allocation2 + $0x30] sm:$0xff]
    %v318 = vld [vmem:[#allocation2 + $0x38] sm:$0xff]
    %v320 = vsel %vm92, %v303, 0
    %v323 = vsel %vm92, %v304, 0
    %v326 = vsel %vm92, %v305, 0
    %v329 = vsel %vm92, %v306, 0
    %v332 = vsel %vm92, %v307, 0
    %v335 = vsel %vm92, %v308, 0
    %v338 = vsel %vm92, %v309, 0
    %v341 = vsel %vm92, %v310, 0
    %343 = vmatpush.msra.mxu0 0.0
    %344 = vmatpush.msra.mxu0 0.0
    %345 = vmatpush.msra.mxu0 0.0
    %346 = vmatpush.msra.mxu0 0.0
    %347 = vmatpush.msra.mxu0 0.0
    %348 = vmatpush.msra.mxu0 0.0
    %349 = vmatpush.msra.mxu0 0.0
    %350 = vmatpush.msra.mxu0 0.0
    %351 = vmatpush.msra.mxu0 %v318
    %352 = vmatpush.msra.mxu0 %v317
    %353 = vmatpush.msra.mxu0 %v316
    %354 = vmatpush.msra.mxu0 %v315
    %355 = vmatpush.msra.mxu0 %v314
    %356 = vmatpush.msra.mxu0 %v313
    %357 = vmatpush.msra.mxu0 %v312
    %358 = vmatpush.msra.mxu0 %v311
    %359 = vmatmul.f32.gmra.mxu0 %v320
    %v360 = vpop.f32.mrf.mxu0
    %v361 = vadd.f32 0.0, %v360
    %362 = vmatmul.f32.gmra.mxu0 %v323
    %v363 = vpop.f32.mrf.mxu0
    %v364 = vadd.f32 0.0, %v363
    %365 = vmatmul.f32.gmra.mxu0 %v326
    %v366 = vpop.f32.mrf.mxu0
    %v367 = vadd.f32 0.0, %v366
    %368 = vmatmul.f32.gmra.mxu0 %v329
    %v369 = vpop.f32.mrf.mxu0
    %v370 = vadd.f32 0.0, %v369
    %371 = vmatmul.f32.gmra.mxu0 %v332
    %v372 = vpop.f32.mrf.mxu0
    %v373 = vadd.f32 0.0, %v372
    %374 = vmatmul.f32.gmra.mxu0 %v335
    %v375 = vpop.f32.mrf.mxu0
    %v376 = vadd.f32 0.0, %v375
    %377 = vmatmul.f32.gmra.mxu0 %v338
    %v378 = vpop.f32.mrf.mxu0
    %v379 = vadd.f32 0.0, %v378
    %380 = vmatmul.f32.gmra.mxu0 %v341
    %v381 = vpop.f32.mrf.mxu0
    %v382 = vadd.f32 0.0, %v381
    %383 = vdwg.mxu0
    %v384 = vld [vmem:[#allocation3] sm:$0xff]
    %v385 = vld [vmem:[#allocation3 + $0x8] sm:$0xff]
    %v386 = vld [vmem:[#allocation3 + $0x10] sm:$0xff]
    %v387 = vld [vmem:[#allocation3 + $0x18] sm:$0xff]
    %v388 = vld [vmem:[#allocation3 + $0x20] sm:$0xff]
    %v389 = vld [vmem:[#allocation3 + $0x28] sm:$0xff]
    %v390 = vld [vmem:[#allocation3 + $0x30] sm:$0xff]
    %v391 = vld [vmem:[#allocation3 + $0x38] sm:$0xff]
    %v392 = vadd.f32 %v384, %v361
    %v393 = vadd.f32 %v385, %v364
    %v394 = vadd.f32 %v386, %v367
    %v395 = vadd.f32 %v387, %v370
    %v396 = vadd.f32 %v388, %v373
    %v397 = vadd.f32 %v389, %v376
    %v398 = vadd.f32 %v390, %v379
    %v399 = vadd.f32 %v391, %v382
    %400 = vst [vmem:[#allocation3] sm:$0xff] %v392
    %401 = vst [vmem:[#allocation3 + $0x8] sm:$0xff] %v393
    %402 = vst [vmem:[#allocation3 + $0x10] sm:$0xff] %v394
    %403 = vst [vmem:[#allocation3 + $0x18] sm:$0xff] %v395
    %404 = vst [vmem:[#allocation3 + $0x20] sm:$0xff] %v396
    %405 = vst [vmem:[#allocation3 + $0x28] sm:$0xff] %v397
    %406 = vst [vmem:[#allocation3 + $0x30] sm:$0xff] %v398
    %407 = vst [vmem:[#allocation3 + $0x38] sm:$0xff] %v399
    %408 = vst [vmem:[#allocation2] sm:$0xff] %v361
    %409 = vst [vmem:[#allocation2 + $0x8] sm:$0xff] %v364
    %410 = vst [vmem:[#allocation2 + $0x10] sm:$0xff] %v367
    %411 = vst [vmem:[#allocation2 + $0x18] sm:$0xff] %v370
    %412 = vst [vmem:[#allocation2 + $0x20] sm:$0xff] %v373
    %413 = vst [vmem:[#allocation2 + $0x28] sm:$0xff] %v376
    %414 = vst [vmem:[#allocation2 + $0x30] sm:$0xff] %v379
    %415 = vst [vmem:[#allocation2 + $0x38] sm:$0xff] %v382
    %v416 = vld [vmem:[#allocation3] sm:$0xff]
    %v417 = vld [vmem:[#allocation3 + $0x8] sm:$0xff]
    %v418 = vld [vmem:[#allocation3 + $0x10] sm:$0xff]
    %v419 = vld [vmem:[#allocation3 + $0x18] sm:$0xff]
    %v420 = vld [vmem:[#allocation3 + $0x20] sm:$0xff]
    %v421 = vld [vmem:[#allocation3 + $0x28] sm:$0xff]
    %v422 = vld [vmem:[#allocation3 + $0x30] sm:$0xff]
    %v423 = vld [vmem:[#allocation3 + $0x38] sm:$0xff]
    %424 = vst [vmem:[#allocation9] sm:$0xff] %v416
    %425 = vst [vmem:[#allocation9 + $0x8] sm:$0xff] %v417
    %426 = vst [vmem:[#allocation9 + $0x10] sm:$0xff] %v418
    %427 = vst [vmem:[#allocation9 + $0x18] sm:$0xff] %v419
    %428 = vst [vmem:[#allocation9 + $0x20] sm:$0xff] %v420
    %429 = vst [vmem:[#allocation9 + $0x28] sm:$0xff] %v421
    %430 = vst [vmem:[#allocation9 + $0x30] sm:$0xff] %v422
    %431 = vst [vmem:[#allocation9 + $0x38] sm:$0xff] %v423
    // Predicated region
    $region18: #{overlap_graph_convolution.1} parent=1 // pred_check
      _
    $region19: #{overlap_graph_convolution.1} parent=1 // pred_check_branch
      %433 = sbr.rel (0) target = $region21
    $region20: #{overlap_graph_convolution.1} parent=1 // pred_region
      %435 = vsyncadd [#allocation6], 0
      %s436 = sshll.u32 [#allocation9], 4
      %s437 = int_to_ptr.vmem [resolvable:$true] %s436
      %s438 = sshll.u32 %s2, 4
      %s439 = int_to_ptr.hbm [resolvable:$true] %s438
      %444 = dma.vmem_to_hbm [thread:$0]  %s437, 1024, %s439, [#allocation6], 128, 128, 8
    $region21: #{overlap_graph_convolution.1} parent=1 // pred_fallthru
      _
    // Predicated region
    $region22: #{overlap_graph_convolution.1} parent=1 // pred_check
      _
    $region23: #{overlap_graph_convolution.1} parent=1 // pred_check_branch
      %446 = sbr.rel (0) target = $region25
    $region24: #{overlap_graph_convolution.1} parent=1 // pred_region
      %448 = dma.done [#allocation6], 1024
    $region25: #{overlap_graph_convolution.1} parent=1 // pred_fallthru
      _
    %449 = vsyncpa [#allocation5], 1
    %450 = vsyncpa [#allocation8], 1
    %451 = vsyncpa [#allocation6], 1

</llo_original>
